<compile_context>
chip_gen: v7x
topology: tpu7x:2x2x1
jax: 0.10.0
libtpu: 0.0.40
codegen_flags: <defaults>
</compile_context>

<pallas_src>
import functools

import jax
import jax.numpy as jnp
from jax.experimental import pallas as pl
from jax.experimental.pallas import tpu as pltpu


def _round_up(x, m):
    return ((x + m - 1) // m) * m


def _bce_partial(x, kps, valid=None):
    """Fused log-sum-exp BCE partial sum.  x: (TB, C) f32, kps: (TB, 1) i32.

    Returns the (1, 8, C) lane-dense partial of the *negated* clamped log
    terms (i.e. the BCE contribution of this tile), summed over sublane
    groups only (pure VPU adds, no per-block scalar reduce).
    """
    tb, c = x.shape
    m = jnp.max(x, axis=1, keepdims=True)                # (TB, 1)
    xs = x - m                                           # (TB, C)
    e = jnp.exp(xs)                                      # EUP #1
    s = jnp.sum(e, axis=1, keepdims=True)                # (TB, 1)
    log_s = jnp.log(s)                                   # 1 log per row

    col = jax.lax.broadcasted_iota(jnp.int32, (tb, c), 1)
    # Select FIRST, then subtract log_s once and clamp once (torch clamps both
    # log terms at -100; only the selected branch matters, so this is exact).
    t = jnp.where(col == kps, xs, jnp.log(s - e))        # EUP #2
    clamped = jnp.maximum(t - log_s, -100.0)             # (TB, C)

    if valid is not None:
        clamped = jnp.where(valid, clamped, 0.0)

    partial = jnp.sum(clamped.reshape(tb // 8, 8, c), axis=0)   # (8, C)
    return (-partial).reshape(1, 8, c)                   # single negate


def _pck_partial_kernel(pred_ref, kps_ref, out_ref, *, batch, block_rows,
                        masked_tail):
    i = pl.program_id(0)
    x = pred_ref[...].astype(jnp.float32)                # (TB, Cp)
    kps = kps_ref[...]                                   # (TB, 1) int32
    tb = x.shape[0]

    if masked_tail:
        last = pl.num_programs(0) - 1

        @pl.when(i != last)
        def _():
            out_ref[...] = _bce_partial(x, kps)

        @pl.when(i == last)
        def _():
            row = i * block_rows + jax.lax.broadcasted_iota(
                jnp.int32, (tb, 1), 0)
            valid = row < batch
            # Zero padded rows *before* exp so no math runs on uninitialized
            # tile data; their bce is then masked to exactly 0.
            xm = jnp.where(valid, x, 0.0)
            out_ref[...] = _bce_partial(xm, kps, valid=valid)
    else:
        out_ref[...] = _bce_partial(x, kps)


def _pick_block_rows(batch, num_classes, itemsize, vmem_budget_bytes):
    # Live VMEM per grid step (approx):
    #   double-buffered pred tile : 2 * tb * C * itemsize
    #   double-buffered kps tile  : 2 * tb * 4
    #   ~5 f32 intermediates      : 5 * tb * C * 4   (x, xs, e, t, clamped)
    bytes_per_row = 2 * num_classes * itemsize + 8 + 5 * num_classes * 4
    tb = vmem_budget_bytes // max(1, bytes_per_row)
    tb = max(8, (tb // 8) * 8)
    # Guarantee >= 4 grid programs whenever the batch permits, so BlockSpec
    # double-buffering hides HBM and both v7x TensorCores get work.
    tb = min(tb, max(8, _round_up((batch + 3) // 4, 8)))
    tb = min(tb, _round_up(batch, 8))
    return int(tb)


def benchmark_loss(pred, kps, *, block_rows=None,
                   vmem_budget_bytes=20 * 1024 * 1024):
    """BenchMarkLoss.forward: input_var = (pred, kps) -> {'total': loss_pck}."""
    B, C = pred.shape
    kps2d = kps.reshape(B, 1).astype(jnp.int32)

    # Lane-align the class axis: pad to a multiple of 128 with a very negative
    # logit.  exp underflows to exactly 0, so padded columns contribute exactly
    # 0 to the BCE sum (log(s-0)-log(s) == 0); the divisor below uses the true
    # B*C, so the result is exact.
    Cp = _round_up(C, 128)
    if Cp != C:
        if jnp.issubdtype(pred.dtype, jnp.floating):
            pad_val = float(jnp.finfo(pred.dtype).min)
        else:
            pad_val = -1e9
        pred = jnp.pad(pred, ((0, 0), (0, Cp - C)), constant_values=pad_val)
    # TODO(synk): for very small C (e.g. 17 keypoints) a transposed layout
    # (batch rows on the 128-lane axis) would beat padding; not needed for the
    # typical C >= 128 case.

    itemsize = jnp.dtype(pred.dtype).itemsize
    if block_rows is None:
        block_rows = _pick_block_rows(B, Cp, itemsize, vmem_budget_bytes)
    tb = int(block_rows)
    assert tb % 8 == 0, "block_rows must be a multiple of 8"
    num_blocks = -(-B // tb)
    masked_tail = (B % tb) != 0

    kernel = functools.partial(_pck_partial_kernel, batch=B, block_rows=tb,
                               masked_tail=masked_tail)

    partials = pl.pallas_call(
        kernel,
        out_shape=jax.ShapeDtypeStruct((num_blocks, 8, Cp), jnp.float32),
        grid=(num_blocks,),
        in_specs=[
            pl.BlockSpec((tb, Cp), lambda i: (i, 0)),   # pred row tile -> VMEM
            pl.BlockSpec((tb, 1), lambda i: (i, 0)),    # kps row tile  -> VMEM
        ],
        out_specs=pl.BlockSpec((1, 8, Cp), lambda i: (i, 0, 0)),
        compiler_params=pltpu.CompilerParams(
            dimension_semantics=("parallel",),
            vmem_limit_bytes=32 * 1024 * 1024,
        ),
        cost_estimate=pl.CostEstimate(
            flops=8 * B * Cp,
            transcendentals=2 * B * Cp + B,
            bytes_accessed=B * Cp * itemsize + B * 4 + num_blocks * 8 * Cp * 4,
        ),
    )(pred, kps2d)

    loss = jnp.sum(partials) / jnp.float32(B * C)

    # pred_kp_idx (argmax over dim=1) is computed in PCKLoss but discarded by
    # BenchMarkLoss, so it is not returned here.
    return {"total": loss}


def _reference(pred, kps):
    """Pure-JAX reference matching torch semantics (for sanity check)."""
    p = jax.nn.softmax(pred.astype(jnp.float32), axis=1)
    y = jax.nn.one_hot(kps, pred.shape[1], dtype=jnp.float32)
    log_p = jnp.maximum(jnp.log(p), -100.0)
    log_1mp = jnp.maximum(jnp.log(1.0 - p), -100.0)
    return jnp.mean(-(y * log_p + (1.0 - y) * log_1mp))


if __name__ == "__main__":
    key = jax.random.PRNGKey(0)
    k_pred, k_kps, k_pred2, k_kps2 = jax.random.split(key, 4)

    # Primary case: B not a multiple of the row tile -> exercises the
    # last-block-only row masking; C already a multiple of 128 -> no padding.
    B, C = 20, 128
    pred = jax.random.normal(k_pred, (B, C), dtype=jnp.float32)
    kps = jax.random.randint(k_kps, (B,), 0, C, dtype=jnp.int32)

    out = benchmark_loss(pred, kps)
    total = jax.block_until_ready(out["total"])
    ref = _reference(pred, kps)
    assert jnp.allclose(total, ref, rtol=1e-5, atol=1e-5), (total, ref)

    # Secondary case: C not a multiple of 128 -> exercises the exact class
    # padding path (and again the masked tail block).
    B2, C2 = 12, 72
    pred2 = jax.random.normal(k_pred2, (B2, C2), dtype=jnp.float32)
    kps2 = jax.random.randint(k_kps2, (B2,), 0, C2, dtype=jnp.int32)
    out2 = benchmark_loss(pred2, kps2)
    total2 = jax.block_until_ready(out2["total"])
    ref2 = _reference(pred2, kps2)
    assert jnp.allclose(total2, ref2, rtol=1e-5, atol=1e-5), (total2, ref2)

    print("KERNEL_OK")
</pallas_src>

<mosaic_0001>
module attributes {stable_mosaic.version = 11 : i64} {
  func.func @_pck_partial_kernel(%arg0: i32, %arg1: memref<8x128xf32, #tpu.memory_space<vmem>>, %arg2: memref<8x1xi32, #tpu.memory_space<vmem>>, %arg3: memref<1x8x128xf32, #tpu.memory_space<vmem>>) attributes {dimension_semantics = [#tpu.dimension_semantics<parallel>], iteration_bounds = array<i64: 3>, scalar_prefetch = 0 : i64, scratch_operands = 0 : i64, tpu.core_type = #tpu.core_type<tc>, window_params = [{transform_indices = @transform_0, window_bounds = array<i64: 8, 128>}, {transform_indices = @transform_1, window_bounds = array<i64: 8, 1>}, {transform_indices = @transform_2, window_bounds = array<i64: 1, 8, 128>}]} {
    %c0 = arith.constant 0 : index
    %c0_0 = arith.constant 0 : index
    %0 = vector.load %arg1[%c0, %c0_0] : memref<8x128xf32, #tpu.memory_space<vmem>>, vector<8x128xf32>
    %c0_1 = arith.constant 0 : index
    %c0_2 = arith.constant 0 : index
    %1 = vector.load %arg2[%c0_1, %c0_2] : memref<8x1xi32, #tpu.memory_space<vmem>>, vector<8x1xi32>
    %c2_i32 = arith.constant 2 : i32
    %2 = arith.cmpi ne, %arg0, %c2_i32 : i32
    %3 = arith.extui %2 : i1 to i32
    %c0_i32 = arith.constant 0 : i32
    %4 = arith.cmpi ne, %3, %c0_i32 : i32
    scf.if %4 {
      %cst = arith.constant dense<0xFF800000> : vector<8xf32>
      %8 = vector.multi_reduction <maximumf>, %0, %cst [1] : vector<8x128xf32> to vector<8xf32>
      %9 = vector.shape_cast %8 : vector<8xf32> to vector<8x1xf32>
      %10 = vector.broadcast %9 : vector<8x1xf32> to vector<8x128xf32>
      %11 = arith.subf %0, %10 : vector<8x128xf32>
      %12 = math.exp %11 : vector<8x128xf32>
      %cst_5 = arith.constant dense<0.000000e+00> : vector<8xf32>
      %13 = vector.multi_reduction <add>, %12, %cst_5 [1] : vector<8x128xf32> to vector<8xf32>
      %14 = vector.shape_cast %13 : vector<8xf32> to vector<8x1xf32>
      %15 = math.log %14 : vector<8x1xf32>
      %16 = tpu.iota {dimensions = array<i32: 1>} : vector<8x128xi32>
      %17 = vector.broadcast %1 : vector<8x1xi32> to vector<8x128xi32>
      %18 = arith.cmpi eq, %16, %17 : vector<8x128xi32>
      %19 = vector.broadcast %14 : vector<8x1xf32> to vector<8x128xf32>
      %20 = arith.subf %19, %12 : vector<8x128xf32>
      %21 = math.log %20 : vector<8x128xf32>
      %22 = arith.select %18, %11, %21 : vector<8x128xi1>, vector<8x128xf32>
      %23 = vector.broadcast %15 : vector<8x1xf32> to vector<8x128xf32>
      %24 = arith.subf %22, %23 : vector<8x128xf32>
      %cst_6 = arith.constant -1.000000e+02 : f32
      %25 = vector.broadcast %cst_6 : f32 to vector<8x128xf32>
      %26 = arith.maximumf %24, %25 : vector<8x128xf32>
      %27 = vector.shape_cast %26 : vector<8x128xf32> to vector<1x8x128xf32>
      %cst_7 = arith.constant dense<0.000000e+00> : vector<8x128xf32>
      %28 = vector.multi_reduction <add>, %27, %cst_7 [0] : vector<1x8x128xf32> to vector<8x128xf32>
      %cst_8 = arith.constant 0.000000e+00 : f32
      %29 = vector.broadcast %cst_8 : f32 to vector<8x128xf32>
      %30 = arith.subf %29, %28 : vector<8x128xf32>
      %31 = vector.shape_cast %30 : vector<8x128xf32> to vector<1x8x128xf32>
      %c0_9 = arith.constant 0 : index
      %c0_10 = arith.constant 0 : index
      %c0_11 = arith.constant 0 : index
      %32 = vector.load %arg3[%c0_9, %c0_10, %c0_11] : memref<1x8x128xf32, #tpu.memory_space<vmem>>, vector<1x8x128xf32>
      tpu.vector_store %arg3[%c0_9, %c0_10, %c0_11], %31 {strides = array<i32>} : memref<1x8x128xf32, #tpu.memory_space<vmem>>, vector<1x8x128xf32>,
    } else {
    }
    %c2_i32_3 = arith.constant 2 : i32
    %5 = arith.cmpi eq, %arg0, %c2_i32_3 : i32
    %6 = arith.extui %5 : i1 to i32
    %c0_i32_4 = arith.constant 0 : i32
    %7 = arith.cmpi ne, %6, %c0_i32_4 : i32
    scf.if %7 {
      %c8_i32 = arith.constant 8 : i32
      %8 = arith.muli %arg0, %c8_i32 : i32
      %9 = tpu.iota {dimensions = array<i32: 0>} : vector<8x1xi32>
      %10 = vector.broadcast %8 : i32 to vector<8x1xi32>
      %11 = arith.addi %10, %9 : vector<8x1xi32>
      %c20_i32 = arith.constant 20 : i32
      %12 = vector.broadcast %c20_i32 : i32 to vector<8x1xi32>
      %13 = arith.cmpi slt, %11, %12 : vector<8x1xi32>
      %cst = arith.constant 0.000000e+00 : f32
      %14 = vector.shape_cast %13 : vector<8x1xi1> to vector<8x1xi1>
      %15 = vector.broadcast %14 : vector<8x1xi1> to vector<8x128xi1>
      %16 = vector.broadcast %cst : f32 to vector<8x128xf32>
      %17 = arith.select %15, %0, %16 : vector<8x128xi1>, vector<8x128xf32>
      %cst_5 = arith.constant dense<0xFF800000> : vector<8xf32>
      %18 = vector.multi_reduction <maximumf>, %17, %cst_5 [1] : vector<8x128xf32> to vector<8xf32>
      %19 = vector.shape_cast %18 : vector<8xf32> to vector<8x1xf32>
      %20 = vector.broadcast %19 : vector<8x1xf32> to vector<8x128xf32>
      %21 = arith.subf %17, %20 : vector<8x128xf32>
      %22 = math.exp %21 : vector<8x128xf32>
      %cst_6 = arith.constant dense<0.000000e+00> : vector<8xf32>
      %23 = vector.multi_reduction <add>, %22, %cst_6 [1] : vector<8x128xf32> to vector<8xf32>
      %24 = vector.shape_cast %23 : vector<8xf32> to vector<8x1xf32>
      %25 = math.log %24 : vector<8x1xf32>
      %26 = tpu.iota {dimensions = array<i32: 1>} : vector<8x128xi32>
      %27 = vector.broadcast %1 : vector<8x1xi32> to vector<8x128xi32>
      %28 = arith.cmpi eq, %26, %27 : vector<8x128xi32>
      %29 = vector.broadcast %24 : vector<8x1xf32> to vector<8x128xf32>
      %30 = arith.subf %29, %22 : vector<8x128xf32>
      %31 = math.log %30 : vector<8x128xf32>
      %32 = arith.select %28, %21, %31 : vector<8x128xi1>, vector<8x128xf32>
      %33 = vector.broadcast %25 : vector<8x1xf32> to vector<8x128xf32>
      %34 = arith.subf %32, %33 : vector<8x128xf32>
      %cst_7 = arith.constant -1.000000e+02 : f32
      %35 = vector.broadcast %cst_7 : f32 to vector<8x128xf32>
      %36 = arith.maximumf %34, %35 : vector<8x128xf32>
      %cst_8 = arith.constant 0.000000e+00 : f32
      %37 = vector.shape_cast %13 : vector<8x1xi1> to vector<8x1xi1>
      %38 = vector.broadcast %37 : vector<8x1xi1> to vector<8x128xi1>
      %39 = vector.broadcast %cst_8 : f32 to vector<8x128xf32>
      %40 = arith.select %38, %36, %39 : vector<8x128xi1>, vector<8x128xf32>
      %41 = vector.shape_cast %40 : vector<8x128xf32> to vector<1x8x128xf32>
      %cst_9 = arith.constant dense<0.000000e+00> : vector<8x128xf32>
      %42 = vector.multi_reduction <add>, %41, %cst_9 [0] : vector<1x8x128xf32> to vector<8x128xf32>
      %cst_10 = arith.constant 0.000000e+00 : f32
      %43 = vector.broadcast %cst_10 : f32 to vector<8x128xf32>
      %44 = arith.subf %43, %42 : vector<8x128xf32>
      %45 = vector.shape_cast %44 : vector<8x128xf32> to vector<1x8x128xf32>
      %c0_11 = arith.constant 0 : index
      %c0_12 = arith.constant 0 : index
      %c0_13 = arith.constant 0 : index
      %46 = vector.load %arg3[%c0_11, %c0_12, %c0_13] : memref<1x8x128xf32, #tpu.memory_space<vmem>>, vector<1x8x128xf32>
      tpu.vector_store %arg3[%c0_11, %c0_12, %c0_13], %45 {strides = array<i32>} : memref<1x8x128xf32, #tpu.memory_space<vmem>>, vector<1x8x128xf32>,
    } else {
    }
    return
  }
  func.func @transform_0(%arg0: i32) -> (i32, i32) {
    %c0_i32 = arith.constant 0 : i32
    %c0_i32_0 = arith.constant 0 : i32
    return %arg0, %c0_i32 : i32, i32
  }
  func.func @transform_1(%arg0: i32) -> (i32, i32) {
    %c0_i32 = arith.constant 0 : i32
    %c0_i32_0 = arith.constant 0 : i32
    return %arg0, %c0_i32 : i32, i32
  }
  func.func @transform_2(%arg0: i32) -> (i32, i32, i32) {
    %c0_i32 = arith.constant 0 : i32
    %c0_i32_0 = arith.constant 0 : i32
    %c0_i32_1 = arith.constant 0 : i32
    return %arg0, %c0_i32, %c0_i32_0 : i32, i32, i32
  }
}

</mosaic_0001>

<llo_original>
// kernel: tpu_custom_call.1
$region0: #{tpu_custom_call.1}
  #allocation0 [shape = 'u32[]', space=smem, size = 0x4, offset = 0x4, fixed_abs, tag = 'smem constant byte address 0x4 - core index']
  #allocation1 [shape = 'u32[144,128]{1,0:T(1,128)}', space=vmem, size = 0x12000, scoped, tag = 'internal scratch']
  %s0 = inlined_call_operand.vmem [shape: f32[20,128], index: 0, kind: input, shape index: {}]
  %s1 = inlined_call_operand.vmem [shape: s32[20,1], index: 1, kind: input, shape index: {}]
  %s2 = inlined_call_operand.hbm [shape: f32[3,8,128], index: 2, kind: output, shape index: {}]
  %s3 = sld [smem:[#allocation0]]
  $region49: #{tpu_custom_call.1} parent=0
    _
  %s5 = ssub.s32 1, %s3
  %s6 = scalar_select 0, %s5, %s3
  $region1: #{tpu_custom_call.1} parent=0
    #allocation2 [shape = 'u8[8192]{0}', space=vmem, size = 0x2000, scoped, tag = 'output window, operand 0']
    #allocation3 [shape = 's32[2]{0}', space=sflag, size = 0x8, scoped, tag = 'scoped memory for tpu_custom_call.1']
    %7 = vsyncpa [#allocation3], 0
    %s8 = scalar_lea.sflag [#allocation3], 1
    %9 = vsyncpa %s8, 0
    loop: start=0, step=1, limit=5
    $region2: #{tpu_custom_call.1} parent=1 // loop_pre_header
      _
    $region3: #{tpu_custom_call.1} parent=1 // loop_header
      %s11 = sphi 0, %s15
      %p12 = scmp.ge.s32.totalorder %s11, 5
      %s21 = sphi 0, %s23
      %s24 = sphi 0, %s21
      %s25 = sphi 0, %s24
      %s41 = sphi 0, %s25
      %s47 = sphi 0, %s49
      %s50 = sphi 0, %s47
      %s51 = sphi 0, %s50
      %s67 = sphi 0, %s51
      %s73 = sphi 0, %s75
      %s76 = sphi 0, %s73
      %s77 = sphi 0, %s76
      %s93 = sphi 0, %s77
    $region4: #{tpu_custom_call.1} parent=1 // loop_header_branch
      %14 = sbr.rel (%p12) target = $region8
    $region5: #{tpu_custom_call.1} parent=1 // loop_body
      %s16 = ssub.s32 %s11, 1
      %s17 = ssub.s32 %s11, 2
      %s18 = sadd.s32 %s11, 1
      %s19 = ssub.s32 %s11, %s18
      %p20 = scmp.eq.s32.totalorder %s19, 0
      %s22 = sadd.s32 %s21, 1
      %s23 = scalar_select %p20, %s21, %s22
      %p26 = pneg %p20
      %p27 = scmp.eq.s32.totalorder %s11, 2
      %p28 = por %p26, %p27
      %p29 = scmp.ne.s32.totalorder %s21, %s24
      %p30 = scmp.eq.s32.totalorder %s11, 0
      %p31 = por %p29, %p30
      %p32 = scmp.ne.s32.totalorder %s21, %s24
      %p33 = scmp.eq.s32.totalorder %s16, 2
      %p34 = por %p32, %p33
      %p35 = scmp.ne.s32.totalorder %s24, %s25
      %p36 = scmp.eq.s32.totalorder %s16, 0
      %p37 = por %p35, %p36
      %p38 = scmp.ne.s32.totalorder %s24, %s25
      %p39 = scmp.eq.s32.totalorder %s17, 2
      %p40 = por %p38, %p39
      %p42 = scmp.ne.s32.totalorder %s25, %s41
      %p43 = scmp.eq.s32.totalorder %s17, 0
      %p44 = por %p42, %p43
      %s45 = ssub.s32 %s11, %s18
      %p46 = scmp.eq.s32.totalorder %s45, 0
      %s48 = sadd.s32 %s47, 1
      %s49 = scalar_select %p46, %s47, %s48
      %p52 = pneg %p46
      %p53 = scmp.eq.s32.totalorder %s11, 2
      %p54 = por %p52, %p53
      %p55 = scmp.ne.s32.totalorder %s47, %s50
      %p56 = scmp.eq.s32.totalorder %s11, 0
      %p57 = por %p55, %p56
      %p58 = scmp.ne.s32.totalorder %s47, %s50
      %p59 = scmp.eq.s32.totalorder %s16, 2
      %p60 = por %p58, %p59
      %p61 = scmp.ne.s32.totalorder %s50, %s51
      %p62 = scmp.eq.s32.totalorder %s16, 0
      %p63 = por %p61, %p62
      %p64 = scmp.ne.s32.totalorder %s50, %s51
      %p65 = scmp.eq.s32.totalorder %s17, 2
      %p66 = por %p64, %p65
      %p68 = scmp.ne.s32.totalorder %s51, %s67
      %p69 = scmp.eq.s32.totalorder %s17, 0
      %p70 = por %p68, %p69
      %s71 = ssub.s32 %s11, %s18
      %p72 = scmp.eq.s32.totalorder %s71, 0
      %s74 = sadd.s32 %s73, 1
      %s75 = scalar_select %p72, %s73, %s74
      %p78 = pneg %p72
      %p79 = scmp.eq.s32.totalorder %s11, 2
      %p80 = por %p78, %p79
      %p81 = scmp.ne.s32.totalorder %s73, %s76
      %p82 = scmp.eq.s32.totalorder %s11, 0
      %p83 = por %p81, %p82
      %p84 = scmp.ne.s32.totalorder %s73, %s76
      %p85 = scmp.eq.s32.totalorder %s16, 2
      %p86 = por %p84, %p85
      %p87 = scmp.ne.s32.totalorder %s76, %s77
      %p88 = scmp.eq.s32.totalorder %s16, 0
      %p89 = por %p87, %p88
      %p90 = scmp.ne.s32.totalorder %s76, %s77
      %p91 = scmp.eq.s32.totalorder %s17, 2
      %p92 = por %p90, %p91
      %p94 = scmp.ne.s32.totalorder %s77, %s93
      %p95 = scmp.eq.s32.totalorder %s17, 0
      %p96 = por %p94, %p95
      %p97 = scmp.le.s32.totalorder 1, %s11
      %p98 = scmp.lt.s32.totalorder %s11, 4
      %p99 = pnand %p97, %p98
      %p100 = pneg %p99
      // Predicated region
      $region9: #{tpu_custom_call.1} parent=5 // pred_check
        _
      $region10: #{tpu_custom_call.1} parent=5 // pred_check_branch
        %102 = sbr.rel (%p99) target = $region12
      $region11: #{tpu_custom_call.1} parent=5 // pred_region
        %s103 = ssub.s32 %s11, 1
      $region12: #{tpu_custom_call.1} parent=5 // pred_fallthru
        _
      %p104 = scmp.lt.s32.totalorder %s11, 3
      // Predicated region
      $region13: #{tpu_custom_call.1} parent=5 // pred_check
        %p105 = pneg %p104
      $region14: #{tpu_custom_call.1} parent=5 // pred_check_branch
        %107 = sbr.rel (%p105) target = $region16
      $region15: #{tpu_custom_call.1} parent=5 // pred_region
        // Predicated region
        $region17: #{tpu_custom_call.1} parent=15 // pred_check
          %p108 = pneg %p31
        $region18: #{tpu_custom_call.1} parent=15 // pred_check_branch
          %110 = sbr.rel (%p108) target = $region20
        $region19: #{tpu_custom_call.1} parent=15 // pred_region
          %p111 = scmp.lt.s32.totalorder %s11, 2
          %s112 = scalar_select %p111, %s11, 2
          %s113 = smul.addr %s112, 8
          %s114 = scalar_lea.vmem %s0, %s113
        $region20: #{tpu_custom_call.1} parent=15 // pred_fallthru
          _
        // Predicated region
        $region21: #{tpu_custom_call.1} parent=15 // pred_check
          %p115 = pneg %p57
        $region22: #{tpu_custom_call.1} parent=15 // pred_check_branch
          %117 = sbr.rel (%p115) target = $region24
        $region23: #{tpu_custom_call.1} parent=15 // pred_region
          %p118 = scmp.lt.s32.totalorder %s11, 2
          %s119 = scalar_select %p118, %s11, 2
          %s120 = smul.addr %s119, 8
          %s121 = scalar_lea.vmem %s1, %s120
        $region24: #{tpu_custom_call.1} parent=15 // pred_fallthru
          _
      $region16: #{tpu_custom_call.1} parent=5 // pred_fallthru
        _
      %p122 = scmp.le.s32.totalorder 1, %s11
      %p123 = scmp.lt.s32.totalorder %s11, 4
      %p124 = pnand %p122, %p123
      %p125 = pneg %p124
      // Predicated region
      $region25: #{tpu_custom_call.1} parent=5 // pred_check
        _
      $region26: #{tpu_custom_call.1} parent=5 // pred_check_branch
        %127 = sbr.rel (%p124) target = $region28
      $region27: #{tpu_custom_call.1} parent=5 // pred_region
        %s128 = ssub.s32 %s11, 1
        %p129 = scmp.lt.s32.totalorder %s16, 2
        %s130 = scalar_select %p129, %s16, 2
        %s131 = smul.addr %s130, 8
        %s132 = scalar_lea.vmem %s0, %s131
        %p133 = pneg %p37
        %p134 = pneg %p34
        %p135 = scmp.lt.s32.totalorder %s16, 2
        %s136 = scalar_select %p135, %s16, 2
        %s137 = smul.addr %s136, 8
        %s138 = scalar_lea.vmem %s1, %s137
        %p139 = pneg %p63
        %p140 = pneg %p60
        %p141 = pneg %p89
        %p142 = pneg %p86
        %s143 = sand.u32 %s76, 1
        %s144 = scalar_lea.sflag [#allocation3], %s143
        %s145 = sand.u32 %s76, 1
        %s146 = smul.addr %s145, 8
        %s147 = scalar_lea.vmem [#allocation2], %s146
        %p148 = scmp.lt.s32.totalorder %s16, 2
        %s149 = scalar_select %p148, %s16, 2
        %s150 = smul.addr %s149, 8
        %s151 = scalar_lea.vmem %s0, %s150
        %p152 = scmp.lt.s32.totalorder %s16, 2
        %s153 = scalar_select %p152, %s16, 2
        %s154 = smul.addr %s153, 8
        %s155 = scalar_lea.vmem %s1, %s154
        %v156 = vld [vmem:[%s151] sm:$0xff]
        %v157 = vld [vmem:[%s155] sm:$0xff]
        %p158 = scmp.ne.s32.totalorder %s16, 2
        // Predicated region
        $region29: #{tpu_custom_call.1} parent=27 // pred_check
          %p159 = pneg %p158
        $region30: #{tpu_custom_call.1} parent=27 // pred_check_branch
          %161 = sbr.rel (%p159) target = $region32
        $region31: #{tpu_custom_call.1} parent=27 // pred_region
          %162 = vmax.xlane.f32.xlu0 %v156
          %v163 = vpop.xlane.xlu0 %162
          %v164 = vsub.f32 %v156, %v163
          %v165 = vmul.f32 %v164, 1.442695
          %v166 = vpow.pop %v165
          %167 = vadd.xlane.f32.xlu0 %v166
          %v168 = vpop.xlane.xlu0 %167
          %v169 = vlog2.pop %v168
          %v170 = vmul.f32 %v169, 0.6931472
          %v171 = vlaneseq
          %v172 = vand.u32 %v171, 127
          %173 = vset.pattern.permute.xlu0 0
          %174 = vperm.xlu0 %173, %v157
          %v175 = vpop.permute.xlu0 %174
          %vm176 = vcmp.eq.s32.totalorder %v172, %v175
          %v177 = vsub.f32 %v168, %v166
          %v178 = vlog2.pop %v177
          %v179 = vmul.f32 %v178, 0.6931472
          %v180 = vsel %vm176, %v164, %v179
          %v181 = vsub.f32 %v180, %v170
          %v182 = vmax.f32 %v181, -100.0
          %v183 = vadd.f32 %v182, 0.0
          %v184 = vsub.f32 0.0, %v183
          %185 = vst [vmem:[%s147] sm:$0xff] %v184
        $region32: #{tpu_custom_call.1} parent=27 // pred_fallthru
          _
        %p186 = scmp.eq.s32.totalorder %s16, 2
        // Predicated region
        $region33: #{tpu_custom_call.1} parent=27 // pred_check
          %p187 = pneg %p186
        $region34: #{tpu_custom_call.1} parent=27 // pred_check_branch
          %189 = sbr.rel (%p187) target = $region36
        $region35: #{tpu_custom_call.1} parent=27 // pred_region
          %s190 = smul.u32 %s16, 8
          %v191 = vlaneseq
          %v192 = vshrl.u32 %v191, 7
          %v193 = vstv %s190
          %v194 = vadd.s32 %v193, %v192
          %vm195 = vcmp.lt.s32.totalorder %v194, 20
          %v196 = vsel %vm195, 1, 0
          %vm197 = vcmp.eq.s32.totalorder %v196, 1
          %v198 = vsel %vm197, %v156, 0.0
          %199 = vmax.xlane.f32.xlu0 %v198
          %v200 = vpop.xlane.xlu0 %199
          %v201 = vsub.f32 %v198, %v200
          %v202 = vmul.f32 %v201, 1.442695
          %v203 = vpow.pop %v202
          %204 = vadd.xlane.f32.xlu0 %v203
          %v205 = vpop.xlane.xlu0 %204
          %v206 = vlog2.pop %v205
          %v207 = vmul.f32 %v206, 0.6931472
          %v208 = vlaneseq
          %v209 = vand.u32 %v208, 127
          %210 = vset.pattern.permute.xlu0 0
          %211 = vperm.xlu0 %210, %v157
          %v212 = vpop.permute.xlu0 %211
          %vm213 = vcmp.eq.s32.totalorder %v209, %v212
          %v214 = vsub.f32 %v205, %v203
          %v215 = vlog2.pop %v214
          %v216 = vmul.f32 %v215, 0.6931472
          %v217 = vsel %vm213, %v201, %v216
          %v218 = vsub.f32 %v217, %v207
          %v219 = vmax.f32 %v218, -100.0
          %v220 = vsel %vm197, %v219, 0.0
          %v221 = vadd.f32 %v220, 0.0
          %v222 = vsub.f32 0.0, %v221
          %223 = vst [vmem:[%s147] sm:$0xff] %v222
        $region36: #{tpu_custom_call.1} parent=27 // pred_fallthru
          _
        %s224 = sand.u32 %s76, 1
        %s225 = scalar_lea.sflag [#allocation3], %s224
        %s226 = sand.u32 %s76, 1
        %s227 = smul.addr %s226, 8
        %s228 = scalar_lea.vmem [#allocation2], %s227
        // Predicated region
        $region37: #{tpu_custom_call.1} parent=27 // pred_check
          %p229 = pneg %p86
        $region38: #{tpu_custom_call.1} parent=27 // pred_check_branch
          %231 = sbr.rel (%p229) target = $region40
        $region39: #{tpu_custom_call.1} parent=27 // pred_region
          %s233 = ssub.s32 128, 128
          %234 = vsyncadd %s225, %s233
          %s235 = smul.addr %s16, 128
          %s236 = scalar_lea.hbm %s2, %s235
          %s238 = sshll.u32 %s228, 4
          %s239 = int_to_ptr.vmem [resolvable:$true] %s238
          %241 = dma.vmem_to_hbm [thread:$0]  %s239, 128, %s236, %s225
        $region40: #{tpu_custom_call.1} parent=27 // pred_fallthru
          _
      $region28: #{tpu_custom_call.1} parent=5 // pred_fallthru
        _
      %p242 = scmp.le.s32.totalorder 2, %s11
      // Predicated region
      $region41: #{tpu_custom_call.1} parent=5 // pred_check
        %p243 = pneg %p242
      $region42: #{tpu_custom_call.1} parent=5 // pred_check_branch
        %245 = sbr.rel (%p243) target = $region44
      $region43: #{tpu_custom_call.1} parent=5 // pred_region
        %s246 = ssub.s32 %s11, 2
        // Predicated region
        $region45: #{tpu_custom_call.1} parent=43 // pred_check
          %p247 = pneg %p92
        $region46: #{tpu_custom_call.1} parent=43 // pred_check_branch
          %249 = sbr.rel (%p247) target = $region48
        $region47: #{tpu_custom_call.1} parent=43 // pred_region
          %s250 = sand.u32 %s77, 1
          %s251 = scalar_lea.sflag [#allocation3], %s250
          %s252 = sand.u32 %s77, 1
          %s253 = smul.addr %s252, 8
          %s254 = scalar_lea.vmem [#allocation2], %s253
          %255 = dma.done %s251, 128
        $region48: #{tpu_custom_call.1} parent=43 // pred_fallthru
          _
      $region44: #{tpu_custom_call.1} parent=5 // pred_fallthru
        _
    $region6: #{tpu_custom_call.1} parent=1 // loop_footer
      %s15 = sadd.s32 1, %s11
    $region7: #{tpu_custom_call.1} parent=1 // loop_footer_branch
      %10 = sbr.rel target = $region3
    $region8: #{tpu_custom_call.1} parent=1 // loop_exit
      _
    %256 = vsyncpa [#allocation3], 1
    %s257 = scalar_lea.sflag [#allocation3], 1
    %258 = vsyncpa %s257, 1

</llo_original>
